<compile_context>
chip_gen: v5e
topology: v5e:2x2
jax: 0.10.0
libtpu: 0.0.40
codegen_flags: <defaults>
</compile_context>

<pallas_src>
import jax
import jax.numpy as jnp
import numpy as np
from jax.experimental import pallas as pl
from jax.experimental.pallas import tpu as pltpu


# ----------------------------- Pallas kernel -----------------------------
def _pooler_kernel(x_ref, w_ref, b_ref, out_ref):
  # x_ref:   (TB, H)  f32  first-token activations
  # w_ref:   (H, TN)  bf16 weight tile (pre-transposed, (in, out))
  # b_ref:   (1, TN)  f32  bias tile
  # out_ref: (TB, TN) f32
  x = x_ref[...].astype(jnp.bfloat16)                       # cast only at the MXU input
  acc = jnp.dot(x, w_ref[...], preferred_element_type=jnp.float32)
  out_ref[...] = jnp.tanh(acc + b_ref[...])                 # f32 bias add + tanh (EUP)


# ----------------------------- tiling helper -----------------------------
def _pick_tile(dim, target, align):
  """Largest `align`-multiple tile <= target that divides dim, else the full dim."""
  if dim <= target:
    return dim
  t = (target // align) * align
  while t >= align:
    if dim % t == 0:
      return t
    t -= align
  return dim


# ----------------------------- wrapper -----------------------------
def bert_pooler(hidden_states, weight_t_bf16, bias):
  """tanh(hidden_states[:, 0] @ W + b) with W given as (in, out) bf16."""
  B, S, H = hidden_states.shape
  Hin, Hout = weight_t_bf16.shape
  assert Hin == H and bias.shape == (1, Hout)

  # First-token slice is layout glue outside the kernel (only B*H elements).
  x0 = hidden_states[:, 0, :].astype(jnp.float32)           # (B, H)

  tb = _pick_tile(B, 256, 8)        # row tile (full B if small / not 8-aligned)
  tn = _pick_tile(Hout, 512, 128)   # lane-dense output-column tile
  grid = (B // tb, Hout // tn)

  return pl.pallas_call(
      _pooler_kernel,
      out_shape=jax.ShapeDtypeStruct((B, Hout), jnp.float32),
      grid=grid,
      in_specs=[
          pl.BlockSpec((tb, H), lambda i, j: (i, 0)),       # activations (full K)
          pl.BlockSpec((H, tn), lambda i, j: (0, j)),       # bf16 weight tile
          pl.BlockSpec((1, tn), lambda i, j: (0, j)),       # bias tile
      ],
      out_specs=pl.BlockSpec((tb, tn), lambda i, j: (i, j)),
      compiler_params=pltpu.CompilerParams(
          dimension_semantics=("parallel", "parallel")),
  )(x0, weight_t_bf16, bias)


# ----------------------------- demo -----------------------------
if __name__ == "__main__":
  B, S, H = 2, 8, 32

  key = jax.random.PRNGKey(0)
  k_x, k_w, k_b = jax.random.split(key, 3)

  hidden_states = jax.random.normal(k_x, (B, S, H), jnp.float32)
  # torch nn.Linear weight is (out, in); store pre-transposed (in, out), bf16 for the MXU.
  weight_t = (jax.random.normal(k_w, (H, H), jnp.float32) * 0.02)
  weight_t_bf16 = weight_t.astype(jnp.bfloat16)
  bias = (jax.random.normal(k_b, (1, H), jnp.float32) * 0.02)

  pooled = bert_pooler(hidden_states, weight_t_bf16, bias)
  jax.block_until_ready(pooled)

  # Pure-JAX reference (same bf16-rounded weight so only MXU accumulation differs).
  x0 = hidden_states[:, 0, :]
  ref = jnp.tanh(x0 @ weight_t_bf16.astype(jnp.float32) + bias)
  np.testing.assert_allclose(np.asarray(pooled), np.asarray(ref), rtol=2e-2, atol=2e-2)

  print("KERNEL_OK")
</pallas_src>

<mosaic_0001>
module attributes {stable_mosaic.version = 11 : i64} {
  func.func @_pooler_kernel(%arg0: i32, %arg1: i32, %arg2: memref<2x32xf32, #tpu.memory_space<vmem>>, %arg3: memref<32x32xbf16, #tpu.memory_space<vmem>>, %arg4: memref<1x32xf32, #tpu.memory_space<vmem>>, %arg5: memref<2x32xf32, #tpu.memory_space<vmem>>) attributes {dimension_semantics = [#tpu.dimension_semantics<parallel>, #tpu.dimension_semantics<parallel>], iteration_bounds = array<i64: 1, 1>, scalar_prefetch = 0 : i64, scratch_operands = 0 : i64, tpu.core_type = #tpu.core_type<tc>, window_params = [{transform_indices = @transform_0, window_bounds = array<i64: 2, 32>}, {transform_indices = @transform_1, window_bounds = array<i64: 32, 32>}, {transform_indices = @transform_2, window_bounds = array<i64: 1, 32>}, {transform_indices = @transform_3, window_bounds = array<i64: 2, 32>}]} {
    %c0 = arith.constant 0 : index
    %c0_0 = arith.constant 0 : index
    %0 = vector.load %arg2[%c0, %c0_0] : memref<2x32xf32, #tpu.memory_space<vmem>>, vector<2x32xf32>
    %1 = arith.truncf %0 : vector<2x32xf32> to vector<2x32xbf16>
    %c0_1 = arith.constant 0 : index
    %c0_2 = arith.constant 0 : index
    %2 = vector.load %arg3[%c0_1, %c0_2] : memref<32x32xbf16, #tpu.memory_space<vmem>>, vector<32x32xbf16>
    %cst = arith.constant dense<0.000000e+00> : vector<2x32xf32>
    %3 = tpu.matmul %1, %2, %cst {dimension_numbers = #tpu.dot_dimension_numbers<[1], [0], [0], [1], [0, 0, 1, 1], [], []>} : vector<2x32xbf16>, vector<32x32xbf16>, vector<2x32xf32> -> vector<2x32xf32>
    %c0_3 = arith.constant 0 : index
    %c0_4 = arith.constant 0 : index
    %4 = vector.load %arg4[%c0_3, %c0_4] : memref<1x32xf32, #tpu.memory_space<vmem>>, vector<1x32xf32>
    %5 = vector.broadcast %4 : vector<1x32xf32> to vector<2x32xf32>
    %6 = arith.addf %3, %5 : vector<2x32xf32>
    %7 = math.tanh %6 : vector<2x32xf32>
    %c0_5 = arith.constant 0 : index
    %c0_6 = arith.constant 0 : index
    %8 = vector.load %arg5[%c0_5, %c0_6] : memref<2x32xf32, #tpu.memory_space<vmem>>, vector<2x32xf32>
    tpu.vector_store %arg5[%c0_5, %c0_6], %7 {strides = array<i32>} : memref<2x32xf32, #tpu.memory_space<vmem>>, vector<2x32xf32>,
    return
  }
  func.func @transform_0(%arg0: i32, %arg1: i32) -> (i32, i32) {
    %c0_i32 = arith.constant 0 : i32
    %c0_i32_0 = arith.constant 0 : i32
    return %arg0, %c0_i32 : i32, i32
  }
  func.func @transform_1(%arg0: i32, %arg1: i32) -> (i32, i32) {
    %c0_i32 = arith.constant 0 : i32
    %c0_i32_0 = arith.constant 0 : i32
    return %c0_i32, %arg1 : i32, i32
  }
  func.func @transform_2(%arg0: i32, %arg1: i32) -> (i32, i32) {
    %c0_i32 = arith.constant 0 : i32
    %c0_i32_0 = arith.constant 0 : i32
    return %c0_i32, %arg1 : i32, i32
  }
  func.func @transform_3(%arg0: i32, %arg1: i32) -> (i32, i32) {
    %c0_i32 = arith.constant 0 : i32
    return %arg0, %arg1 : i32, i32
  }
}

</mosaic_0001>

<llo_original>
// kernel: tpu_custom_call.1
$region0: #{tpu_custom_call.1}
  #allocation0 [shape = 'u32[]', space=smem, size = 0x4, offset = 0x4, fixed_abs, tag = 'smem constant byte address 0x4 - core index']
  #allocation1 [shape = 'u32[72,128]{1,0:T(1,128)}', space=vmem, size = 0x9000, scoped, tag = 'internal scratch']
  %s0 = inlined_call_operand.hbm [shape: f32[2,32], index: 0, kind: input, shape index: {}]
  %s1 = inlined_call_operand.hbm [shape: bf16[32,32], index: 1, kind: input, shape index: {}]
  %s2 = inlined_call_operand.vmem [shape: f32[1,32], index: 2, kind: input, shape index: {}]
  %s3 = inlined_call_operand.hbm [shape: f32[2,32], index: 3, kind: output, shape index: {}]
  %s4 = sld [smem:[#allocation0]]
  $region30: #{tpu_custom_call.1} parent=0
    _
  %s6 = ssub.s32 1, %s4
  %s7 = scalar_select 0, %s6, %s4
  $region1: #{tpu_custom_call.1} parent=0
    #allocation2 [shape = 'u8[1024]{0}', space=vmem, size = 0x400, scoped, tag = 'input window, operand 0, single buffered']
    #allocation3 [shape = 's32[1]{0}', space=sflag, size = 0x4, scoped, tag = 'scoped memory for tpu_custom_call.1']
    #allocation4 [shape = 's32[1]{0}', space=sflag, size = 0x4, scoped, tag = 'scoped memory for tpu_custom_call.1']
    #allocation5 [shape = 'u8[8192]{0}', space=vmem, size = 0x2000, scoped, tag = 'input window, operand 1, single buffered']
    #allocation6 [shape = 's32[1]{0}', space=sflag, size = 0x4, scoped, tag = 'scoped memory for tpu_custom_call.1']
    #allocation7 [shape = 'u8[1024]{0}', space=vmem, size = 0x400, scoped, tag = 'output window, operand 0, single buffered']
    %8 = vsyncpa [#allocation3], 0
    %9 = vsyncpa [#allocation6], 0
    %10 = vsyncpa [#allocation4], 0
    // Predicated region
    $region2: #{tpu_custom_call.1} parent=1 // pred_check
      _
    $region3: #{tpu_custom_call.1} parent=1 // pred_check_branch
      %12 = sbr.rel (0) target = $region5
    $region4: #{tpu_custom_call.1} parent=1 // pred_region
      %14 = vsyncadd [#allocation3], 0
      %s16 = sshll.u32 %s0, 4
      %s17 = int_to_ptr.hbm [resolvable:$true] %s16
      %s18 = sshll.u32 [#allocation2], 4
      %s19 = int_to_ptr.vmem [resolvable:$true] %s18
      %21 = dma.hbm_to_vmem [thread:$0]  %s17, 32, %s19, [#allocation3]
    $region5: #{tpu_custom_call.1} parent=1 // pred_fallthru
      _
    // Predicated region
    $region6: #{tpu_custom_call.1} parent=1 // pred_check
      _
    $region7: #{tpu_custom_call.1} parent=1 // pred_check_branch
      %23 = sbr.rel (0) target = $region9
    $region8: #{tpu_custom_call.1} parent=1 // pred_region
      %25 = vsyncadd [#allocation6], 0
      %s26 = sshll.u32 %s1, 4
      %s27 = int_to_ptr.hbm [resolvable:$true] %s26
      %s28 = sshll.u32 [#allocation5], 4
      %s29 = int_to_ptr.vmem [resolvable:$true] %s28
      %34 = dma.hbm_to_vmem [thread:$0]  %s27, 256, %s29, [#allocation6], 64, 64, 4
    $region9: #{tpu_custom_call.1} parent=1 // pred_fallthru
      _
    // Predicated region
    $region10: #{tpu_custom_call.1} parent=1 // pred_check
      _
    $region11: #{tpu_custom_call.1} parent=1 // pred_check_branch
      %36 = sbr.rel (0) target = $region13
    $region12: #{tpu_custom_call.1} parent=1 // pred_region
      _
    $region13: #{tpu_custom_call.1} parent=1 // pred_fallthru
      _
    // Predicated region
    $region14: #{tpu_custom_call.1} parent=1 // pred_check
      _
    $region15: #{tpu_custom_call.1} parent=1 // pred_check_branch
      %38 = sbr.rel (0) target = $region17
    $region16: #{tpu_custom_call.1} parent=1 // pred_region
      %40 = dma.done [#allocation3], 32
    $region17: #{tpu_custom_call.1} parent=1 // pred_fallthru
      _
    // Predicated region
    $region18: #{tpu_custom_call.1} parent=1 // pred_check
      _
    $region19: #{tpu_custom_call.1} parent=1 // pred_check_branch
      %42 = sbr.rel (0) target = $region21
    $region20: #{tpu_custom_call.1} parent=1 // pred_region
      %44 = dma.done [#allocation6], 256
    $region21: #{tpu_custom_call.1} parent=1 // pred_fallthru
      _
    %v46 = vld [vmem:[#allocation2] sm:$0x3]
    %v47 = vpack.c.bf16 %v46, %v46
    %v48 = vld [vmem:[#allocation5] sm:$0xf]
    %v49 = vld [vmem:[#allocation5 + $0x4] sm:$0xf]
    %v50 = vld [vmem:[#allocation5 + $0x8] sm:$0xf]
    %v51 = vld [vmem:[#allocation5 + $0xc] sm:$0xf]
    %v52 = vld [vmem:[%s2] sm:$0x1]
    %v54 = vperm.slane %v52, 0
    %v60 = vunpack.c.l.b16 %v48
    %v61 = vunpack.c.l.b16 %v49
    %v62 = vunpack.c.l.b16 %v50
    %v63 = vunpack.c.l.b16 %v51
    %v64 = vpack.c.b16 %v61, %v60
    %v65 = vpack.c.b16 %v63, %v62
    %vm68 = vcmask 261120
    %v70 = vsel %vm68, %v47, 0
    %72 = vmatpush.bf16.msra.mxu0 0
    %73 = vmatpush.bf16.msra.mxu0 0
    %74 = vmatpush.bf16.msra.mxu0 0
    %75 = vmatpush.bf16.msra.mxu0 0
    %76 = vmatpush.bf16.msra.mxu0 0
    %77 = vmatpush.bf16.msra.mxu0 0
    %78 = vmatpush.bf16.msra.mxu0 %v65
    %79 = vmatpush.bf16.msra.mxu0 %v64
    %80 = vmatmul.bf16.gmra.mxu0 %v70
    %v81 = vpop.f32.mrf.mxu0
    %v82 = vadd.f32 %v54, %v81
    %v83 = vpop.f32.mrf.mxu0
    %84 = vdwg.mxu0
    %v85 = vtanh.pop %v82
    %vm86 = vcmask 254976
    %87 = vst.msk [vmem:[#allocation7] sm:$0x3] %vm86, %v85
    // Predicated region
    $region22: #{tpu_custom_call.1} parent=1 // pred_check
      _
    $region23: #{tpu_custom_call.1} parent=1 // pred_check_branch
      %89 = sbr.rel (0) target = $region25
    $region24: #{tpu_custom_call.1} parent=1 // pred_region
      %91 = vsyncadd [#allocation4], 0
      %s93 = sshll.u32 [#allocation7], 4
      %s94 = int_to_ptr.vmem [resolvable:$true] %s93
      %s95 = sshll.u32 %s3, 4
      %s96 = int_to_ptr.hbm [resolvable:$true] %s95
      %98 = dma.vmem_to_hbm [thread:$0]  %s94, 32, %s96, [#allocation4]
    $region25: #{tpu_custom_call.1} parent=1 // pred_fallthru
      _
    // Predicated region
    $region26: #{tpu_custom_call.1} parent=1 // pred_check
      _
    $region27: #{tpu_custom_call.1} parent=1 // pred_check_branch
      %100 = sbr.rel (0) target = $region29
    $region28: #{tpu_custom_call.1} parent=1 // pred_region
      %102 = dma.done [#allocation4], 32
    $region29: #{tpu_custom_call.1} parent=1 // pred_fallthru
      _
    %103 = vsyncpa [#allocation3], 1
    %104 = vsyncpa [#allocation6], 1
    %105 = vsyncpa [#allocation4], 1

</llo_original>
